<compile_context>
chip_gen: v7x
topology: tpu7x:2x2x1
jax: 0.10.0
libtpu: 0.0.40
codegen_flags: <defaults>
</compile_context>

<pallas_src>
import functools
import math

import jax
import jax.numpy as jnp
from jax.experimental import pallas as pl
from jax.experimental.pallas import tpu as pltpu


def _round_up(x, n):
    return ((x + n - 1) // n) * n


def _gelu_tanh(x):
    # PyTorch nn.GELU(approximate='tanh'):
    # 0.5 * x * (1 + tanh(sqrt(2/pi) * (x + 0.044715 * x^3)))
    c = math.sqrt(2.0 / math.pi)
    return 0.5 * x * (1.0 + jnp.tanh(c * (x + 0.044715 * x * x * x)))


# --------------------------------------------------------------- kernels ----

def _ffn_kernel_f32out(x_ref, w1_ref, b1_ref, w2_ref, b2_ref, o_ref):
    """f32-output variant: accumulate straight into the resident output tile."""
    hk = pl.program_id(1)

    @pl.when(hk == 0)
    def _():
        o_ref[...] = jnp.broadcast_to(b2_ref[...], o_ref.shape)

    x = x_ref[...].astype(w1_ref.dtype)            # in-kernel cast (free filler)
    h = jnp.dot(x, w1_ref[...], preferred_element_type=jnp.float32)
    h = _gelu_tanh(h + b1_ref[...])                # bias + GELU in f32
    o_ref[...] += jnp.dot(h.astype(w2_ref.dtype), w2_ref[...],
                          preferred_element_type=jnp.float32)


def _ffn_kernel_acc(x_ref, w1_ref, b1_ref, w2_ref, b2_ref, o_ref, acc_ref):
    """Generic-output variant: f32 scratch accumulator, cast on the last step."""
    hk = pl.program_id(1)

    @pl.when(hk == 0)
    def _():
        acc_ref[...] = jnp.broadcast_to(b2_ref[...], acc_ref.shape)

    x = x_ref[...].astype(w1_ref.dtype)
    h = jnp.dot(x, w1_ref[...], preferred_element_type=jnp.float32)
    h = _gelu_tanh(h + b1_ref[...])
    acc_ref[...] += jnp.dot(h.astype(w2_ref.dtype), w2_ref[...],
                            preferred_element_type=jnp.float32)

    @pl.when(hk == pl.num_programs(1) - 1)
    def _():
        o_ref[...] = acc_ref[...].astype(o_ref.dtype)


# ----------------------------------------------------- chip / tile heuristics

@functools.lru_cache(maxsize=1)
def _chip_info():
    kind = ""
    try:
        kind = jax.devices()[0].device_kind.lower()
    except Exception:
        pass
    vmem = None
    try:
        vmem = int(getattr(pltpu.get_tpu_info(), "vmem_capacity_bytes", 0)) or None
    except Exception:
        pass
    is_v5 = "v5" in kind
    is_v7 = ("v7" in kind) or ("tpu7" in kind)
    if vmem is None:
        # 128 MiB on v4/v5e/v6e parts, 64 MiB otherwise (conservative / v7x).
        vmem = (128 << 20) if (is_v5 or "v6" in kind or "v4" in kind) else (64 << 20)
    if not is_v7 and vmem <= (64 << 20):
        is_v7 = True                     # treat any 64-MiB-VMEM part like v7x
    return kind, vmem, is_v5, is_v7


def _tile_targets(is_v5, is_v7):
    # (tm_align, tm_target, tm_floor, t_h_target)
    if is_v5:
        return 128, 256, 256, 512        # single TC, 128-wide MXU
    if is_v7:
        return 256, 512, 256, 256        # 64 MiB VMEM: shrink t_h, keep tm big
    return 256, 768, 512, 512            # v6e / other 128-MiB parts


# ------------------------------------------------------------- weight prep --

def _prep_weights(w1, b1, w2, b2, compute_dtype):
    """Pad/cast weights once (hoist out of the per-call path)."""
    _, _, is_v5, is_v7 = _chip_info()
    _, _, _, t_h_target = _tile_targets(is_v5, is_v7)

    hdim = w1.shape[1]
    d_out = w2.shape[1]

    h128 = _round_up(hdim, 128)
    if h128 <= t_h_target:
        h_pad, t_h = h128, h128
    else:
        # Pad H so the H tile is at least 256 wide (never degenerate 128):
        # pad columns of w1/b1 are 0 -> gelu(0) = 0 -> contribute nothing.
        h_pad = _round_up(h128, 256)
        t_h = t_h_target if h_pad % t_h_target == 0 else 256

    d_out_pad = _round_up(d_out, 128)    # lane-dense, unmasked output stores

    w1p = jnp.pad(w1, ((0, 0), (0, h_pad - hdim))).astype(compute_dtype)
    b1p = jnp.pad(b1, (0, h_pad - hdim)).astype(jnp.float32).reshape(1, h_pad)
    w2p = jnp.pad(w2, ((0, h_pad - hdim), (0, d_out_pad - d_out))).astype(compute_dtype)
    b2p = jnp.pad(b2, (0, d_out_pad - d_out)).astype(jnp.float32).reshape(1, d_out_pad)
    return w1p, b1p, w2p, b2p, t_h, d_out


# --------------------------------------------------------------- main call --

def _run_ffn(x, w1p, b1p, w2p, b2p, t_h, d_out, tm=None):
    _, vmem_cap, is_v5, is_v7 = _chip_info()
    align, tm_target, tm_floor, _ = _tile_targets(is_v5, is_v7)

    orig_shape = x.shape
    out_dtype = x.dtype
    d_in = orig_shape[-1]
    h_pad = w1p.shape[1]
    d_out_pad = w2p.shape[1]

    x2 = x.reshape(-1, d_in)
    m = x2.shape[0]
    m8 = _round_up(m, 8)

    out_is_f32 = out_dtype == jnp.float32
    cbytes = jnp.dtype(w1p.dtype).itemsize
    xbytes = jnp.dtype(out_dtype).itemsize
    obytes = xbytes

    # ~12.5% headroom under the physical VMEM for compiler-internal scratch.
    budget = int(vmem_cap * 7 // 8)

    def footprint(tm_, th_):
        dbl = 2 * (tm_ * d_in * xbytes            # x tile (native dtype)
                   + d_in * th_ * cbytes          # w1 tile
                   + th_ * 4                      # b1 tile
                   + th_ * d_out_pad * cbytes     # w2 tile
                   + d_out_pad * 4                # b2 tile
                   + tm_ * d_out_pad * obytes)    # out tile
        scratch = 0 if out_is_f32 else tm_ * d_out_pad * 4
        internal = (tm_ * th_ * (4 + cbytes)      # f32 hidden tile + cast copy
                    + tm_ * d_in * cbytes         # in-kernel x cast copy
                    + tm_ * d_out_pad * 4)        # second-matmul result
        return dbl + scratch + internal

    # ---- M tile selection ---------------------------------------------------
    if tm is None:
        if m8 <= align:
            tm = m8                               # single small tile
        else:
            tm = min(_round_up(m8, align), tm_target)
            # Shrink tm (down to the compute-bound floor), then the H tile,
            # then tm again as a last resort, until we fit the VMEM budget.
            while footprint(tm, t_h) > budget and tm - align >= tm_floor:
                tm -= align
            while footprint(tm, t_h) > budget and t_h > 256 and h_pad % (t_h // 2) == 0:
                t_h //= 2
            while footprint(tm, t_h) > budget and tm > align:
                tm -= align
    else:
        tm = max(8, _round_up(min(tm, m8), 8))

    m_pad = _round_up(m8, tm)
    n_m_tiles = m_pad // tm
    grid = (n_m_tiles, h_pad // t_h)

    # Pad x rows only; NO dtype cast in the wrapper (cast happens in-kernel).
    x2p = jnp.pad(x2, ((0, m_pad - m), (0, 0)))

    fp = footprint(tm, t_h)
    vmem_limit = int(min(int(vmem_cap * 0.9), max(32 << 20, int(1.3 * fp))))

    cost = pl.CostEstimate(
        flops=int(2 * m_pad * (d_in * h_pad + h_pad * d_out_pad)),
        transcendentals=int(m_pad * h_pad),
        # Weights are re-streamed once per M tile.
        bytes_accessed=int(
            x2p.size * xbytes
            + n_m_tiles * ((w1p.size + w2p.size) * cbytes
                           + (b1p.size + b2p.size) * 4)
            + m_pad * d_out_pad * obytes),
    )

    if out_is_f32:
        kernel = _ffn_kernel_f32out
        scratch_shapes = []
    else:
        kernel = _ffn_kernel_acc
        scratch_shapes = [pltpu.VMEM((tm, d_out_pad), jnp.float32)]

    out = pl.pallas_call(
        kernel,
        out_shape=jax.ShapeDtypeStruct((m_pad, d_out_pad), out_dtype),
        grid_spec=pltpu.PrefetchScalarGridSpec(
            num_scalar_prefetch=0,
            grid=grid,
            in_specs=[
                pl.BlockSpec((tm, d_in), lambda i, hk: (i, 0)),         # x
                pl.BlockSpec((d_in, t_h), lambda i, hk: (0, hk)),       # w1
                pl.BlockSpec((1, t_h), lambda i, hk: (0, hk)),          # b1
                pl.BlockSpec((t_h, d_out_pad), lambda i, hk: (hk, 0)),  # w2
                pl.BlockSpec((1, d_out_pad), lambda i, hk: (0, 0)),     # b2
            ],
            out_specs=pl.BlockSpec((tm, d_out_pad), lambda i, hk: (i, 0)),
            scratch_shapes=scratch_shapes,
        ),
        compiler_params=pltpu.CompilerParams(
            dimension_semantics=("parallel", "arbitrary"),
            vmem_limit_bytes=vmem_limit,
        ),
        cost_estimate=cost,
    )(x2p, w1p, b1p, w2p, b2p)

    out = out[:m, :d_out]
    return out.reshape(*orig_shape[:-1], d_out)


# ---------------------------------------------------------------- public API

def make_io_ffn(w1, b1, w2, b2, *, compute_dtype=jnp.bfloat16, tm=None):
    """Pre-pads / casts the weights once and returns `apply(x)`.

    w1: [D_in, H]; b1: [H]; w2: [H, D_out]; b2: [D_out]  (W = nn.Linear.weight.T).
    compute_dtype is the MXU operand dtype (bf16 recommended); bias add, GELU
    and accumulation are always f32.  Output dtype == x.dtype.
    """
    w1p, b1p, w2p, b2p, t_h, d_out = _prep_weights(w1, b1, w2, b2, compute_dtype)

    def apply(x):
        return _run_ffn(x, w1p, b1p, w2p, b2p, t_h, d_out, tm=tm)

    return apply


def io_ffn(x, w1, b1, w2, b2, *, compute_dtype=jnp.bfloat16, tm=None):
    """Convenience one-shot wrapper (pads weights on every call; for repeated
    use, hoist with make_io_ffn)."""
    return make_io_ffn(w1, b1, w2, b2, compute_dtype=compute_dtype, tm=tm)(x)


def reference_ffn(x, w1, b1, w2, b2):
    h = _gelu_tanh(jnp.dot(x, w1) + b1)
    return jnp.dot(h, w2) + b2


if __name__ == "__main__":
    # Small shapes implied by the module: batch=2, seq=8,
    # input_dim=32, hidden_dim=64, output_dim=32.
    batch, seq = 2, 8
    input_dim, hidden_dim, output_dim = 32, 64, 32

    key = jax.random.PRNGKey(0)
    kx, k1, k2, k3, k4 = jax.random.split(key, 5)

    x = jax.random.normal(kx, (batch, seq, input_dim), dtype=jnp.float32)

    lim1 = 1.0 / math.sqrt(input_dim)
    lim2 = 1.0 / math.sqrt(hidden_dim)
    w1 = jax.random.uniform(k1, (input_dim, hidden_dim),
                            minval=-lim1, maxval=lim1, dtype=jnp.float32)
    b1 = jax.random.uniform(k2, (hidden_dim,),
                            minval=-lim1, maxval=lim1, dtype=jnp.float32)
    w2 = jax.random.uniform(k3, (hidden_dim, output_dim),
                            minval=-lim2, maxval=lim2, dtype=jnp.float32)
    b2 = jax.random.uniform(k4, (output_dim,),
                            minval=-lim2, maxval=lim2, dtype=jnp.float32)

    ref = reference_ffn(x, w1, b1, w2, b2)

    # 1) pure-f32 path (f32-output kernel, accumulates into o_ref directly).
    out_f32 = jax.block_until_ready(
        io_ffn(x, w1, b1, w2, b2, compute_dtype=jnp.float32))
    assert out_f32.shape == (batch, seq, output_dim)
    assert jnp.allclose(out_f32, ref, atol=1e-5, rtol=1e-5), \
        "f32 kernel mismatch vs reference"

    # 2) default bf16-MXU-operand path via the cached-weights entry point.
    ffn_bf16 = make_io_ffn(w1, b1, w2, b2)           # weights padded/cast once
    out_bf16 = jax.block_until_ready(ffn_bf16(x))
    assert out_bf16.shape == (batch, seq, output_dim)
    assert jnp.allclose(out_bf16, ref, atol=5e-2, rtol=5e-2), \
        "bf16 kernel mismatch vs reference"

    # 3) non-f32 output dtype exercises the scratch-accumulator kernel, and a
    #    ragged M (not a multiple of 8) exercises the padding path.
    x_bf16 = jax.random.normal(kx, (3, 7, input_dim), dtype=jnp.bfloat16)
    ref_bf16 = reference_ffn(x_bf16.astype(jnp.float32), w1, b1, w2, b2)
    out_bf16_io = jax.block_until_ready(ffn_bf16(x_bf16))
    assert out_bf16_io.shape == (3, 7, output_dim)
    assert out_bf16_io.dtype == jnp.bfloat16
    assert jnp.allclose(out_bf16_io.astype(jnp.float32), ref_bf16,
                        atol=1e-1, rtol=1e-1), "bf16-io kernel mismatch vs reference"

    print("KERNEL_OK")
</pallas_src>

<mosaic_0001>
module attributes {stable_mosaic.version = 11 : i64} {
  func.func @_ffn_kernel_f32out(%arg0: i32, %arg1: i32, %arg2: memref<16x32xf32, #tpu.memory_space<vmem>>, %arg3: memref<32x128xf32, #tpu.memory_space<vmem>>, %arg4: memref<1x128xf32, #tpu.memory_space<vmem>>, %arg5: memref<128x128xf32, #tpu.memory_space<vmem>>, %arg6: memref<1x128xf32, #tpu.memory_space<vmem>>, %arg7: memref<16x128xf32, #tpu.memory_space<vmem>>) attributes {dimension_semantics = [#tpu.dimension_semantics<parallel>, #tpu.dimension_semantics<arbitrary>], iteration_bounds = array<i64: 1, 1>, scalar_prefetch = 0 : i64, scratch_operands = 0 : i64, tpu.core_type = #tpu.core_type<tc>, window_params = [{transform_indices = @transform_0, window_bounds = array<i64: 16, 32>}, {transform_indices = @transform_1, window_bounds = array<i64: 32, 128>}, {transform_indices = @transform_2, window_bounds = array<i64: 1, 128>}, {transform_indices = @transform_3, window_bounds = array<i64: 128, 128>}, {pipeline_mode = #tpu.pipeline_mode<synchronous>, transform_indices = @transform_4, window_bounds = array<i64: 1, 128>}, {transform_indices = @transform_5, window_bounds = array<i64: 16, 128>}]} {
    %c0_i32 = arith.constant 0 : i32
    %0 = arith.cmpi eq, %arg1, %c0_i32 : i32
    %1 = arith.extui %0 : i1 to i32
    %c0_i32_0 = arith.constant 0 : i32
    %2 = arith.cmpi ne, %1, %c0_i32_0 : i32
    scf.if %2 {
      %c0_17 = arith.constant 0 : index
      %c0_18 = arith.constant 0 : index
      %27 = vector.load %arg6[%c0_17, %c0_18] : memref<1x128xf32, #tpu.memory_space<vmem>>, vector<1x128xf32>
      %28 = vector.shape_cast %27 : vector<1x128xf32> to vector<1x128xf32>
      %29 = vector.broadcast %28 : vector<1x128xf32> to vector<16x128xf32>
      %c0_19 = arith.constant 0 : index
      %c0_20 = arith.constant 0 : index
      %30 = vector.load %arg7[%c0_19, %c0_20] : memref<16x128xf32, #tpu.memory_space<vmem>>, vector<16x128xf32>
      tpu.vector_store %arg7[%c0_19, %c0_20], %29 {strides = array<i32>} : memref<16x128xf32, #tpu.memory_space<vmem>>, vector<16x128xf32>,
    } else {
    }
    %c0 = arith.constant 0 : index
    %c0_1 = arith.constant 0 : index
    %3 = vector.load %arg2[%c0, %c0_1] : memref<16x32xf32, #tpu.memory_space<vmem>>, vector<16x32xf32>
    %c0_2 = arith.constant 0 : index
    %c0_3 = arith.constant 0 : index
    %4 = vector.load %arg3[%c0_2, %c0_3] : memref<32x128xf32, #tpu.memory_space<vmem>>, vector<32x128xf32>
    %cst = arith.constant dense<0.000000e+00> : vector<16x128xf32>
    %5 = tpu.matmul %3, %4, %cst {dimension_numbers = #tpu.dot_dimension_numbers<[1], [0], [0], [1], [0, 0, 1, 1], [], []>} : vector<16x32xf32>, vector<32x128xf32>, vector<16x128xf32> -> vector<16x128xf32>
    %c0_4 = arith.constant 0 : index
    %c0_5 = arith.constant 0 : index
    %6 = vector.load %arg4[%c0_4, %c0_5] : memref<1x128xf32, #tpu.memory_space<vmem>>, vector<1x128xf32>
    %7 = vector.broadcast %6 : vector<1x128xf32> to vector<16x128xf32>
    %8 = arith.addf %5, %7 : vector<16x128xf32>
    %cst_6 = arith.constant 5.000000e-01 : f32
    %9 = vector.broadcast %cst_6 : f32 to vector<16x128xf32>
    %10 = arith.mulf %9, %8 : vector<16x128xf32>
    %cst_7 = arith.constant 4.471500e-02 : f32
    %11 = vector.broadcast %cst_7 : f32 to vector<16x128xf32>
    %12 = arith.mulf %11, %8 : vector<16x128xf32>
    %13 = arith.mulf %12, %8 : vector<16x128xf32>
    %14 = arith.mulf %13, %8 : vector<16x128xf32>
    %15 = arith.addf %8, %14 : vector<16x128xf32>
    %cst_8 = arith.constant 0.797884583 : f32
    %16 = vector.broadcast %cst_8 : f32 to vector<16x128xf32>
    %17 = arith.mulf %16, %15 : vector<16x128xf32>
    %18 = math.tanh %17 : vector<16x128xf32>
    %cst_9 = arith.constant 1.000000e+00 : f32
    %19 = vector.broadcast %cst_9 : f32 to vector<16x128xf32>
    %20 = arith.addf %19, %18 : vector<16x128xf32>
    %21 = arith.mulf %10, %20 : vector<16x128xf32>
    %c0_10 = arith.constant 0 : index
    %c0_11 = arith.constant 0 : index
    %22 = vector.load %arg7[%c0_10, %c0_11] : memref<16x128xf32, #tpu.memory_space<vmem>>, vector<16x128xf32>
    %c0_12 = arith.constant 0 : index
    %c0_13 = arith.constant 0 : index
    %23 = vector.load %arg5[%c0_12, %c0_13] : memref<128x128xf32, #tpu.memory_space<vmem>>, vector<128x128xf32>
    %cst_14 = arith.constant dense<0.000000e+00> : vector<16x128xf32>
    %24 = tpu.matmul %21, %23, %cst_14 {dimension_numbers = #tpu.dot_dimension_numbers<[1], [0], [0], [1], [0, 0, 1, 1], [], []>} : vector<16x128xf32>, vector<128x128xf32>, vector<16x128xf32> -> vector<16x128xf32>
    %25 = arith.addf %22, %24 : vector<16x128xf32>
    %c0_15 = arith.constant 0 : index
    %c0_16 = arith.constant 0 : index
    %26 = vector.load %arg7[%c0_15, %c0_16] : memref<16x128xf32, #tpu.memory_space<vmem>>, vector<16x128xf32>
    tpu.vector_store %arg7[%c0_15, %c0_16], %25 {strides = array<i32>} : memref<16x128xf32, #tpu.memory_space<vmem>>, vector<16x128xf32>,
    return
  }
  func.func @transform_0(%arg0: i32, %arg1: i32) -> (i32, i32) {
    %c0_i32 = arith.constant 0 : i32
    %c0_i32_0 = arith.constant 0 : i32
    return %arg0, %c0_i32 : i32, i32
  }
  func.func @transform_1(%arg0: i32, %arg1: i32) -> (i32, i32) {
    %c0_i32 = arith.constant 0 : i32
    %c0_i32_0 = arith.constant 0 : i32
    return %c0_i32, %arg1 : i32, i32
  }
  func.func @transform_2(%arg0: i32, %arg1: i32) -> (i32, i32) {
    %c0_i32 = arith.constant 0 : i32
    %c0_i32_0 = arith.constant 0 : i32
    return %c0_i32, %arg1 : i32, i32
  }
  func.func @transform_3(%arg0: i32, %arg1: i32) -> (i32, i32) {
    %c0_i32 = arith.constant 0 : i32
    %c0_i32_0 = arith.constant 0 : i32
    return %arg1, %c0_i32 : i32, i32
  }
  func.func @transform_4(%arg0: i32, %arg1: i32) -> (i32, i32) {
    %c0_i32 = arith.constant 0 : i32
    %c0_i32_0 = arith.constant 0 : i32
    %c0_i32_1 = arith.constant 0 : i32
    return %c0_i32, %c0_i32_0 : i32, i32
  }
  func.func @transform_5(%arg0: i32, %arg1: i32) -> (i32, i32) {
    %c0_i32 = arith.constant 0 : i32
    %c0_i32_0 = arith.constant 0 : i32
    return %arg0, %c0_i32 : i32, i32
  }
}

</mosaic_0001>

<llo_original>
// kernel: tpu_custom_call.1
$region0: #{tpu_custom_call.1}
  #allocation0 [shape = 'u32[]', space=smem, size = 0x4, offset = 0x4, fixed_abs, tag = 'smem constant byte address 0x4 - core index']
  #allocation1 [shape = 'u32[144,128]{1,0:T(1,128)}', space=vmem, size = 0x12000, scoped, tag = 'internal scratch']
  %s0 = inlined_call_operand.hbm [shape: f32[16,32], index: 0, kind: input, shape index: {}]
  %s1 = inlined_call_operand.hbm [shape: f32[32,128], index: 1, kind: input, shape index: {}]
  %s2 = inlined_call_operand.vmem [shape: f32[1,128], index: 2, kind: input, shape index: {}]
  %s3 = inlined_call_operand.hbm [shape: f32[128,128], index: 3, kind: input, shape index: {}]
  %s4 = inlined_call_operand.vmem [shape: f32[1,128], index: 4, kind: input, shape index: {}]
  %s5 = inlined_call_operand.hbm [shape: f32[16,128], index: 5, kind: output, shape index: {}]
  %s6 = sld [smem:[#allocation0]]
  $region46: #{tpu_custom_call.1} parent=0
    _
  %s8 = ssub.s32 1, %s6
  %s9 = scalar_select 0, %s8, %s6
  $region1: #{tpu_custom_call.1} parent=0
    #allocation2 [shape = 'u8[8192]{0}', space=vmem, size = 0x2000, scoped, tag = 'input window, operand 0, single buffered']
    #allocation3 [shape = 's32[1]{0}', space=sflag, size = 0x4, scoped, tag = 'scoped memory for tpu_custom_call.1']
    #allocation4 [shape = 's32[1]{0}', space=sflag, size = 0x4, scoped, tag = 'scoped memory for tpu_custom_call.1']
    #allocation5 [shape = 'u8[16384]{0}', space=vmem, size = 0x4000, scoped, tag = 'input window, operand 1, single buffered']
    #allocation6 [shape = 's32[1]{0}', space=sflag, size = 0x4, scoped, tag = 'scoped memory for tpu_custom_call.1']
    #allocation7 [shape = 'u8[65536]{0}', space=vmem, size = 0x10000, scoped, tag = 'input window, operand 3, single buffered']
    #allocation8 [shape = 'u8[8192]{0}', space=vmem, size = 0x2000, scoped, tag = 'output window, operand 0, single buffered']
    %10 = vsyncpa [#allocation3], 0
    %11 = vsyncpa [#allocation6], 0
    %12 = vsyncpa [#allocation4], 0
    // Predicated region
    $region2: #{tpu_custom_call.1} parent=1 // pred_check
      _
    $region3: #{tpu_custom_call.1} parent=1 // pred_check_branch
      %14 = sbr.rel (0) target = $region5
    $region4: #{tpu_custom_call.1} parent=1 // pred_region
      %s16 = ssub.s32 256, 256
      %17 = vsyncadd [#allocation3], %s16
      %s18 = sshll.u32 [#allocation2], 4
      %s19 = int_to_ptr.vmem [resolvable:$true] %s18
      %24 = dma.hbm_to_vmem [thread:$0]  %s0, 256, %s19, [#allocation3], 128, 128, 8
    $region5: #{tpu_custom_call.1} parent=1 // pred_fallthru
      _
    // Predicated region
    $region6: #{tpu_custom_call.1} parent=1 // pred_check
      _
    $region7: #{tpu_custom_call.1} parent=1 // pred_check_branch
      %26 = sbr.rel (0) target = $region9
    $region8: #{tpu_custom_call.1} parent=1 // pred_region
      %s28 = ssub.s32 512, 512
      %29 = vsyncadd [#allocation6], %s28
      %s30 = sshll.u32 [#allocation5], 4
      %s31 = int_to_ptr.vmem [resolvable:$true] %s30
      %36 = dma.hbm_to_vmem [thread:$0]  %s1, 512, %s31, [#allocation6], 128, 128, 8
    $region9: #{tpu_custom_call.1} parent=1 // pred_fallthru
      _
    // Predicated region
    $region10: #{tpu_custom_call.1} parent=1 // pred_check
      _
    $region11: #{tpu_custom_call.1} parent=1 // pred_check_branch
      %38 = sbr.rel (0) target = $region13
    $region12: #{tpu_custom_call.1} parent=1 // pred_region
      _
    $region13: #{tpu_custom_call.1} parent=1 // pred_fallthru
      _
    // Predicated region
    $region14: #{tpu_custom_call.1} parent=1 // pred_check
      _
    $region15: #{tpu_custom_call.1} parent=1 // pred_check_branch
      %40 = sbr.rel (0) target = $region17
    $region16: #{tpu_custom_call.1} parent=1 // pred_region
      %s42 = ssub.s32 2048, 2048
      %43 = vsyncadd [#allocation6], %s42
      %s44 = sshll.u32 [#allocation7], 4
      %s45 = int_to_ptr.vmem [resolvable:$true] %s44
      %50 = dma.hbm_to_vmem [thread:$0]  %s3, 2048, %s45, [#allocation6], 128, 128, 8
    $region17: #{tpu_custom_call.1} parent=1 // pred_fallthru
      _
    // Predicated region
    $region18: #{tpu_custom_call.1} parent=1 // pred_check
      _
    $region19: #{tpu_custom_call.1} parent=1 // pred_check_branch
      %52 = sbr.rel (0) target = $region21
    $region20: #{tpu_custom_call.1} parent=1 // pred_region
      _
    $region21: #{tpu_custom_call.1} parent=1 // pred_fallthru
      _
    // Predicated region
    $region22: #{tpu_custom_call.1} parent=1 // pred_check
      _
    $region23: #{tpu_custom_call.1} parent=1 // pred_check_branch
      %54 = sbr.rel (0) target = $region25
    $region24: #{tpu_custom_call.1} parent=1 // pred_region
      %55 = dma.done [#allocation3], 256
    $region25: #{tpu_custom_call.1} parent=1 // pred_fallthru
      _
    // Predicated region
    $region26: #{tpu_custom_call.1} parent=1 // pred_check
      _
    $region27: #{tpu_custom_call.1} parent=1 // pred_check_branch
      %57 = sbr.rel (0) target = $region29
    $region28: #{tpu_custom_call.1} parent=1 // pred_region
      %58 = dma.done [#allocation6], 512
    $region29: #{tpu_custom_call.1} parent=1 // pred_fallthru
      _
    // Predicated region
    $region30: #{tpu_custom_call.1} parent=1 // pred_check
      _
    $region31: #{tpu_custom_call.1} parent=1 // pred_check_branch
      %60 = sbr.rel (0) target = $region33
    $region32: #{tpu_custom_call.1} parent=1 // pred_region
      %61 = dma.done [#allocation6], 2048
    $region33: #{tpu_custom_call.1} parent=1 // pred_fallthru
      _
    %p62 = scmp.eq.s32.totalorder 0, 0
    // Predicated region
    $region34: #{tpu_custom_call.1} parent=1 // pred_check
      %p63 = pneg %p62
    $region35: #{tpu_custom_call.1} parent=1 // pred_check_branch
      %65 = sbr.rel (%p63) target = $region37
    $region36: #{tpu_custom_call.1} parent=1 // pred_region
      %v66 = vld [vmem:[%s4] sm:$0x1]
      %v68 = vlaneseq
      %v69 = vshrl.u32 %v68, 7
      %v70 = vsub.s32 0, %v69
      %v71 = vrot.slane %v66, %v70
      %73 = vst [vmem:[#allocation8] sm:$0xff] %v71
      %74 = vst [vmem:[#allocation8 + $0x8] sm:$0xff] %v71
    $region37: #{tpu_custom_call.1} parent=1 // pred_fallthru
      _
    %v75 = vld [vmem:[#allocation2] sm:$0xff]
    %v76 = vld [vmem:[#allocation2 + $0x8] sm:$0xff]
    %v77 = vld [vmem:[#allocation5] sm:$0xff]
    %v78 = vld [vmem:[#allocation5 + $0x8] sm:$0xff]
    %v79 = vld [vmem:[#allocation5 + $0x10] sm:$0xff]
    %v80 = vld [vmem:[#allocation5 + $0x18] sm:$0xff]
    %v81 = vld [vmem:[%s2] sm:$0x1]
    %v83 = vlaneseq
    %v84 = vshrl.u32 %v83, 7
    %v85 = vsub.s32 0, %v84
    %v86 = vrot.slane %v81, %v85
    %vm88 = vcmask 261120
    %v90 = vsel %vm88, %v75, 0
    %v93 = vsel %vm88, %v76, 0
    %95 = vmatprep.subr.mxu0 0.0
    %96 = vmatpush1.msra.mxu0 %v77
    %97 = vmatprep.subr.mxu0 0.0
    %98 = vmatpush1.msra.mxu0 %v78
    %99 = vmatprep.subr.mxu0 0.0
    %100 = vmatpush1.msra.mxu0 %v79
    %101 = vmatprep.subr.mxu0 0.0
    %102 = vmatpush1.msra.mxu0 %v80
    %103 = vmatprep.subr.mxu0 0.0
    %104 = vmatpush1.msra.mxu0 0.0
    %105 = vmatprep.subr.mxu0 0.0
    %106 = vmatpush1.msra.mxu0 0.0
    %107 = vmatprep.subr.mxu0 0.0
    %108 = vmatpush1.msra.mxu0 0.0
    %109 = vmatprep.subr.mxu0 0.0
    %110 = vmatpush1.msra.mxu0 0.0
    %111 = vmatprep.subr.mxu0 0.0
    %112 = vmatpush1.msra.mxu0 0.0
    %113 = vmatprep.subr.mxu0 0.0
    %114 = vmatpush1.msra.mxu0 0.0
    %115 = vmatprep.subr.mxu0 0.0
    %116 = vmatpush1.msra.mxu0 0.0
    %117 = vmatprep.subr.mxu0 0.0
    %118 = vmatpush1.msra.mxu0 0.0
    %119 = vmatprep.subr.mxu0 0.0
    %120 = vmatpush1.msra.mxu0 0.0
    %121 = vmatprep.subr.mxu0 0.0
    %122 = vmatpush1.msra.mxu0 0.0
    %123 = vmatprep.subr.mxu0 0.0
    %124 = vmatpush1.msra.mxu0 0.0
    %125 = vmatprep.subr.mxu0 0.0
    %126 = vmatpush1.msra.mxu0 0.0
    %127 = vmatprep.subr.mxu0 0.0
    %128 = vmatpush1.msra.mxu0 0.0
    %129 = vmatprep.subr.mxu0 0.0
    %130 = vmatpush1.msra.mxu0 0.0
    %131 = vmatprep.subr.mxu0 0.0
    %132 = vmatpush1.msra.mxu0 0.0
    %133 = vmatprep.subr.mxu0 0.0
    %134 = vmatpush1.msra.mxu0 0.0
    %135 = vmatprep.subr.mxu0 0.0
    %136 = vmatpush1.msra.mxu0 0.0
    %137 = vmatprep.subr.mxu0 0.0
    %138 = vmatpush1.msra.mxu0 0.0
    %139 = vmatprep.subr.mxu0 0.0
    %140 = vmatpush1.msra.mxu0 0.0
    %141 = vmatprep.subr.mxu0 0.0
    %142 = vmatpush1.msra.mxu0 0.0
    %143 = vmatprep.subr.mxu0 0.0
    %144 = vmatpush1.msra.mxu0 0.0
    %145 = vmatprep.subr.mxu0 0.0
    %146 = vmatpush1.msra.mxu0 0.0
    %147 = vmatprep.subr.mxu0 0.0
    %148 = vmatpush1.msra.mxu0 0.0
    %149 = vmatprep.subr.mxu0 0.0
    %150 = vmatpush1.msra.mxu0 0.0
    %151 = vmatprep.subr.mxu0 0.0
    %152 = vmatpush1.msra.mxu0 0.0
    %153 = vmatprep.subr.mxu0 0.0
    %154 = vmatpush1.msra.mxu0 0.0
    %155 = vmatprep.subr.mxu0 0.0
    %156 = vmatpush1.msra.mxu0 0.0
    %157 = vmatprep.subr.mxu0 0.0
    %158 = vmatpush1.msra.mxu0 0.0
    %159 = vmatprep.mubr.f32.mxu0 0.0
    %160 = vmatmul.mubr.f32.gmra.mrb[0].mxu0 %v90
    %v161 = vpop.f32.mrb[0].mxu0
    %v162 = vadd.f32 %v86, %v161
    %v163 = vpop.f32.mrb[0].mxu0
    %164 = vmatprep.mubr.f32.mxu0 0.0
    %165 = vmatmul.mubr.f32.gmra.mrb[0].mxu0 %v93
    %v166 = vpop.f32.mrb[0].mxu0
    %v167 = vadd.f32 %v86, %v166
    %v168 = vpop.f32.mrb[0].mxu0
    %169 = vdwg.mxu0
    %v170 = vmul.f32 %v162, 0.5
    %v171 = vmul.f32 %v167, 0.5
    %v172 = vmul.f32 %v162, 0.044715
    %v173 = vmul.f32 %v167, 0.044715
    %v174 = vmul.f32 %v172, %v162
    %v175 = vmul.f32 %v173, %v167
    %v176 = vmul.f32 %v174, %v162
    %v177 = vmul.f32 %v175, %v167
    %v178 = vadd.f32 %v162, %v176
    %v179 = vadd.f32 %v167, %v177
    %v180 = vmul.f32 %v178, 0.7978846
    %v181 = vmul.f32 %v179, 0.7978846
    %v182 = vtanh.pop %v180
    %v183 = vtanh.pop %v181
    %v184 = vadd.f32 %v182, 1.0
    %v185 = vadd.f32 %v183, 1.0
    %v186 = vmul.f32 %v170, %v184
    %v187 = vmul.f32 %v171, %v185
    %v188 = vld [vmem:[#allocation8] sm:$0xff]
    %v189 = vld [vmem:[#allocation8 + $0x8] sm:$0xff]
    %v190 = vld [vmem:[#allocation7] sm:$0xff]
    %v191 = vld [vmem:[#allocation7 + $0x8] sm:$0xff]
    %v192 = vld [vmem:[#allocation7 + $0x10] sm:$0xff]
    %v193 = vld [vmem:[#allocation7 + $0x18] sm:$0xff]
    %v194 = vld [vmem:[#allocation7 + $0x20] sm:$0xff]
    %v195 = vld [vmem:[#allocation7 + $0x28] sm:$0xff]
    %v196 = vld [vmem:[#allocation7 + $0x30] sm:$0xff]
    %v197 = vld [vmem:[#allocation7 + $0x38] sm:$0xff]
    %v198 = vld [vmem:[#allocation7 + $0x40] sm:$0xff]
    %v199 = vld [vmem:[#allocation7 + $0x48] sm:$0xff]
    %v200 = vld [vmem:[#allocation7 + $0x50] sm:$0xff]
    %v201 = vld [vmem:[#allocation7 + $0x58] sm:$0xff]
    %v202 = vld [vmem:[#allocation7 + $0x60] sm:$0xff]
    %v203 = vld [vmem:[#allocation7 + $0x68] sm:$0xff]
    %v204 = vld [vmem:[#allocation7 + $0x70] sm:$0xff]
    %v205 = vld [vmem:[#allocation7 + $0x78] sm:$0xff]
    %206 = vmatprep.subr.mxu0 0.0
    %207 = vmatpush1.msra.mxu0 %v190
    %208 = vmatprep.subr.mxu0 0.0
    %209 = vmatpush1.msra.mxu0 %v191
    %210 = vmatprep.subr.mxu0 0.0
    %211 = vmatpush1.msra.mxu0 %v192
    %212 = vmatprep.subr.mxu0 0.0
    %213 = vmatpush1.msra.mxu0 %v193
    %214 = vmatprep.subr.mxu0 0.0
    %215 = vmatpush1.msra.mxu0 %v194
    %216 = vmatprep.subr.mxu0 0.0
    %217 = vmatpush1.msra.mxu0 %v195
    %218 = vmatprep.subr.mxu0 0.0
    %219 = vmatpush1.msra.mxu0 %v196
    %220 = vmatprep.subr.mxu0 0.0
    %221 = vmatpush1.msra.mxu0 %v197
    %222 = vmatprep.subr.mxu0 0.0
    %223 = vmatpush1.msra.mxu0 %v198
    %224 = vmatprep.subr.mxu0 0.0
    %225 = vmatpush1.msra.mxu0 %v199
    %226 = vmatprep.subr.mxu0 0.0
    %227 = vmatpush1.msra.mxu0 %v200
    %228 = vmatprep.subr.mxu0 0.0
    %229 = vmatpush1.msra.mxu0 %v201
    %230 = vmatprep.subr.mxu0 0.0
    %231 = vmatpush1.msra.mxu0 %v202
    %232 = vmatprep.subr.mxu0 0.0
    %233 = vmatpush1.msra.mxu0 %v203
    %234 = vmatprep.subr.mxu0 0.0
    %235 = vmatpush1.msra.mxu0 %v204
    %236 = vmatprep.subr.mxu0 0.0
    %237 = vmatpush1.msra.mxu0 %v205
    %238 = vmatprep.subr.mxu0 0.0
    %239 = vmatpush1.msra.mxu0 0.0
    %240 = vmatprep.subr.mxu0 0.0
    %241 = vmatpush1.msra.mxu0 0.0
    %242 = vmatprep.subr.mxu0 0.0
    %243 = vmatpush1.msra.mxu0 0.0
    %244 = vmatprep.subr.mxu0 0.0
    %245 = vmatpush1.msra.mxu0 0.0
    %246 = vmatprep.subr.mxu0 0.0
    %247 = vmatpush1.msra.mxu0 0.0
    %248 = vmatprep.subr.mxu0 0.0
    %249 = vmatpush1.msra.mxu0 0.0
    %250 = vmatprep.subr.mxu0 0.0
    %251 = vmatpush1.msra.mxu0 0.0
    %252 = vmatprep.subr.mxu0 0.0
    %253 = vmatpush1.msra.mxu0 0.0
    %254 = vmatprep.subr.mxu0 0.0
    %255 = vmatpush1.msra.mxu0 0.0
    %256 = vmatprep.subr.mxu0 0.0
    %257 = vmatpush1.msra.mxu0 0.0
    %258 = vmatprep.subr.mxu0 0.0
    %259 = vmatpush1.msra.mxu0 0.0
    %260 = vmatprep.subr.mxu0 0.0
    %261 = vmatpush1.msra.mxu0 0.0
    %262 = vmatprep.subr.mxu0 0.0
    %263 = vmatpush1.msra.mxu0 0.0
    %264 = vmatprep.subr.mxu0 0.0
    %265 = vmatpush1.msra.mxu0 0.0
    %266 = vmatprep.subr.mxu0 0.0
    %267 = vmatpush1.msra.mxu0 0.0
    %268 = vmatprep.subr.mxu0 0.0
    %269 = vmatpush1.msra.mxu0 0.0
    %270 = vmatprep.mubr.f32.mxu0 0.0
    %271 = vmatmul.mubr.f32.gmra.mrb[0].mxu0 %v186
    %v272 = vpop.f32.mrb[0].mxu0
    %v273 = vadd.f32 0.0, %v272
    %v274 = vpop.f32.mrb[0].mxu0
    %275 = vmatprep.mubr.f32.mxu0 0.0
    %276 = vmatmul.mubr.f32.gmra.mrb[0].mxu0 %v187
    %v277 = vpop.f32.mrb[0].mxu0
    %v278 = vadd.f32 0.0, %v277
    %v279 = vpop.f32.mrb[0].mxu0
    %280 = vdwg.mxu0
    %v281 = vadd.f32 %v188, %v273
    %v282 = vadd.f32 %v189, %v278
    %283 = vst [vmem:[#allocation8] sm:$0xff] %v281
    %284 = vst [vmem:[#allocation8 + $0x8] sm:$0xff] %v282
    // Predicated region
    $region38: #{tpu_custom_call.1} parent=1 // pred_check
      _
    $region39: #{tpu_custom_call.1} parent=1 // pred_check_branch
      %286 = sbr.rel (0) target = $region41
    $region40: #{tpu_custom_call.1} parent=1 // pred_region
      %s288 = ssub.s32 256, 256
      %289 = vsyncadd [#allocation4], %s288
      %s290 = sshll.u32 [#allocation8], 4
      %s291 = int_to_ptr.vmem [resolvable:$true] %s290
      %296 = dma.vmem_to_hbm [thread:$0]  %s291, 256, %s5, [#allocation4], 128, 128, 8
    $region41: #{tpu_custom_call.1} parent=1 // pred_fallthru
      _
    // Predicated region
    $region42: #{tpu_custom_call.1} parent=1 // pred_check
      _
    $region43: #{tpu_custom_call.1} parent=1 // pred_check_branch
      %298 = sbr.rel (0) target = $region45
    $region44: #{tpu_custom_call.1} parent=1 // pred_region
      %299 = dma.done [#allocation4], 256
    $region45: #{tpu_custom_call.1} parent=1 // pred_fallthru
      _
    %300 = vsyncpa [#allocation3], 1
    %301 = vsyncpa [#allocation6], 1
    %302 = vsyncpa [#allocation4], 1

</llo_original>
